<compile_context>
chip_gen: v7x
topology: tpu7x:2x2x1
jax: 0.10.0
libtpu: 0.0.40
codegen_flags: <defaults>
</compile_context>

<pallas_src>
import functools

import jax
import jax.numpy as jnp
from jax import lax
from jax.experimental import pallas as pl
from jax.experimental.pallas import tpu as pltpu

LN_EPS = 1e-5


def _gcn_relu_kernel(adj_ref, x_ref, w_ref, b_ref, o_ref):
    # adj_ref: (TM, N)  x_ref: (N, in)  w_ref: (h, in)  b_ref: (1, h)
    # aggregate neighborhoods, then apply the linear layer (W in [out,in]).
    agg = jnp.dot(adj_ref[...], x_ref[...], preferred_element_type=jnp.float32)
    z = lax.dot_general(
        agg.astype(w_ref.dtype), w_ref[...],
        dimension_numbers=(((1,), (1,)), ((), ())),
        preferred_element_type=jnp.float32)
    o_ref[...] = jnp.maximum(z + b_ref[...], 0.0).astype(o_ref.dtype)


def _gcn_ln_kernel(adj_ref, h_ref, w_ref, p_ref, o_ref):
    # adj_ref: (TM, N)  h_ref: (N, h)  w_ref: (c, h)
    # p_ref: (3, c) = [bias; gamma; beta]
    agg = jnp.dot(adj_ref[...], h_ref[...], preferred_element_type=jnp.float32)
    y = lax.dot_general(
        agg.astype(w_ref.dtype), w_ref[...],
        dimension_numbers=(((1,), (1,)), ((), ())),
        preferred_element_type=jnp.float32)
    y = y + p_ref[0:1, :]

    # Single-pass LayerNorm over the feature axis (f32).
    inv_d = 1.0 / y.shape[-1]
    s1 = jnp.sum(y, axis=-1, keepdims=True)
    s2 = jnp.sum(y * y, axis=-1, keepdims=True)
    mean = s1 * inv_d
    var = s2 * inv_d - mean * mean
    inv = lax.rsqrt(var + LN_EPS)
    o_ref[...] = ((y - mean) * inv * p_ref[1:2, :] + p_ref[2:3, :]).astype(o_ref.dtype)


def _round_up(a, m):
    return (a + m - 1) // m * m


@functools.partial(jax.jit, static_argnames=("tile_m", "compute_dtype"))
def decoder_forward(x, adj, w1, b1, w2, b2, gamma, beta, *,
                    tile_m=None, compute_dtype=None):
    """x: [N, in_dim]; adj: [N, N] dense normalized adjacency;
    w1: [h, in], w2: [c, h] (PyTorch Linear layout); b/gamma/beta: 1-D."""
    n, in_dim = x.shape
    h_dim = w1.shape[0]
    c_dim = w2.shape[0]
    out_dtype = x.dtype

    if compute_dtype is not None:
        x = x.astype(compute_dtype)
        adj = adj.astype(compute_dtype)
        w1 = w1.astype(compute_dtype)
        w2 = w2.astype(compute_dtype)

    # Tile selection: whole graph resident for small N (single grid step, no
    # pipeline overhead); 512-row tiles otherwise (keeps VMEM modest on v5e's
    # 16 MiB scoped default and gives >=2 grid steps for v7x's two cores).
    if tile_m is None:
        tile_m = min(n, 512)
    if tile_m >= n:
        tile_m = n
        n_pad = n
    else:
        assert tile_m % 8 == 0, "multi-tile path requires tile_m % 8 == 0"
        n_pad = _round_up(n, tile_m)

    if n_pad != n:
        pad = n_pad - n
        x = jnp.pad(x, ((0, pad), (0, 0)))
        adj = jnp.pad(adj, ((0, pad), (0, pad)))  # zero rows/cols: inert nodes

    b1_r = b1.reshape(1, h_dim).astype(jnp.float32)
    # Coalesce the three loop-invariant (1, c) params into one VMEM input.
    p2 = jnp.stack([b2, gamma, beta], axis=0).astype(jnp.float32)

    grid = (n_pad // tile_m,)
    cparams = pltpu.CompilerParams(dimension_semantics=("parallel",))

    # ---- Layer 1: h = ReLU(adj @ x @ W1^T + b1) -----------------------------
    h = pl.pallas_call(
        _gcn_relu_kernel,
        out_shape=jax.ShapeDtypeStruct((n_pad, h_dim), x.dtype),
        grid_spec=pltpu.PrefetchScalarGridSpec(
            num_scalar_prefetch=0,
            grid=grid,
            in_specs=[
                pl.BlockSpec((tile_m, n_pad), lambda i: (i, 0)),   # adj rows
                pl.BlockSpec((n_pad, in_dim), lambda i: (0, 0)),   # full x
                pl.BlockSpec((h_dim, in_dim), lambda i: (0, 0)),   # W1 [out,in]
                pl.BlockSpec((1, h_dim), lambda i: (0, 0)),        # b1
            ],
            out_specs=pl.BlockSpec((tile_m, h_dim), lambda i: (i, 0)),
        ),
        compiler_params=cparams,
    )(adj, x, w1, b1_r)

    # ---- Layer 2 + LayerNorm: out = LN(adj @ h @ W2^T + b2) -----------------
    out = pl.pallas_call(
        _gcn_ln_kernel,
        out_shape=jax.ShapeDtypeStruct((n_pad, c_dim), out_dtype),
        grid_spec=pltpu.PrefetchScalarGridSpec(
            num_scalar_prefetch=0,
            grid=grid,
            in_specs=[
                pl.BlockSpec((tile_m, n_pad), lambda i: (i, 0)),   # adj rows
                pl.BlockSpec((n_pad, h_dim), lambda i: (0, 0)),    # full h
                pl.BlockSpec((c_dim, h_dim), lambda i: (0, 0)),    # W2 [out,in]
                pl.BlockSpec((3, c_dim), lambda i: (0, 0)),        # b2/gamma/beta
            ],
            out_specs=pl.BlockSpec((tile_m, c_dim), lambda i: (i, 0)),
        ),
        compiler_params=cparams,
    )(adj, h, w2, p2)

    return out[:n]


def decoder_reference(x, adj, w1, b1, w2, b2, gamma, beta):
    h = jnp.maximum(adj @ x @ w1.T + b1, 0.0)
    y = adj @ h @ w2.T + b2
    mean = jnp.mean(y, axis=-1, keepdims=True)
    var = jnp.mean((y - mean) ** 2, axis=-1, keepdims=True)
    return (y - mean) / jnp.sqrt(var + LN_EPS) * gamma + beta


if __name__ == "__main__":
    # Small shapes consistent with Decoder(in_dim, h_dim, out_dim): 16 nodes.
    N, IN_DIM, H_DIM, OUT_DIM = 16, 32, 64, 16

    key = jax.random.PRNGKey(0)
    ka, kx, kw1, kb1, kw2, kb2, kg, kbt = jax.random.split(key, 8)

    # Node features.
    x = jax.random.normal(kx, (N, IN_DIM), dtype=jnp.float32)

    # Dense symmetric adjacency with self-loops, GCN-normalized D^-1/2 A D^-1/2.
    a = (jax.random.uniform(ka, (N, N)) < 0.3).astype(jnp.float32)
    a = jnp.clip(a + a.T + jnp.eye(N, dtype=jnp.float32), 0.0, 1.0)
    deg = a.sum(axis=1)
    d_inv_sqrt = 1.0 / jnp.sqrt(deg)
    adj = d_inv_sqrt[:, None] * a * d_inv_sqrt[None, :]

    # Parameters in PyTorch layout ([out, in] for the linear weights).
    w1 = jax.random.uniform(kw1, (H_DIM, IN_DIM), jnp.float32, -0.1, 0.1)
    b1 = jax.random.uniform(kb1, (H_DIM,), jnp.float32, -0.1, 0.1)
    w2 = jax.random.uniform(kw2, (OUT_DIM, H_DIM), jnp.float32, -0.1, 0.1)
    b2 = jax.random.uniform(kb2, (OUT_DIM,), jnp.float32, -0.1, 0.1)
    gamma = 1.0 + 0.1 * jax.random.normal(kg, (OUT_DIM,), jnp.float32)
    beta = 0.1 * jax.random.normal(kbt, (OUT_DIM,), jnp.float32)

    out = decoder_forward(x, adj, w1, b1, w2, b2, gamma, beta)
    out = jax.block_until_ready(out)

    ref = decoder_reference(x, adj, w1, b1, w2, b2, gamma, beta)
    assert out.shape == (N, OUT_DIM)
    assert jnp.allclose(out, ref, atol=1e-4, rtol=1e-4), "mismatch vs reference"

    print("KERNEL_OK")
</pallas_src>

<mosaic_0001>
module attributes {stable_mosaic.version = 11 : i64} {
  func.func @_gcn_ln_kernel(%arg0: i32, %arg1: memref<16x16xf32, #tpu.memory_space<vmem>>, %arg2: memref<16x64xf32, #tpu.memory_space<vmem>>, %arg3: memref<16x64xf32, #tpu.memory_space<vmem>>, %arg4: memref<3x16xf32, #tpu.memory_space<vmem>>, %arg5: memref<16x16xf32, #tpu.memory_space<vmem>>) attributes {dimension_semantics = [#tpu.dimension_semantics<parallel>], iteration_bounds = array<i64: 1>, scalar_prefetch = 0 : i64, scratch_operands = 0 : i64, tpu.core_type = #tpu.core_type<tc>, window_params = [{transform_indices = @transform_0, window_bounds = array<i64: 16, 16>}, {pipeline_mode = #tpu.pipeline_mode<synchronous>, transform_indices = @transform_1, window_bounds = array<i64: 16, 64>}, {pipeline_mode = #tpu.pipeline_mode<synchronous>, transform_indices = @transform_2, window_bounds = array<i64: 16, 64>}, {pipeline_mode = #tpu.pipeline_mode<synchronous>, transform_indices = @transform_3, window_bounds = array<i64: 3, 16>}, {transform_indices = @transform_4, window_bounds = array<i64: 16, 16>}]} {
    %c0 = arith.constant 0 : index
    %c0_0 = arith.constant 0 : index
    %0 = vector.load %arg1[%c0, %c0_0] : memref<16x16xf32, #tpu.memory_space<vmem>>, vector<16x16xf32>
    %c0_1 = arith.constant 0 : index
    %c0_2 = arith.constant 0 : index
    %1 = vector.load %arg2[%c0_1, %c0_2] : memref<16x64xf32, #tpu.memory_space<vmem>>, vector<16x64xf32>
    %cst = arith.constant dense<0.000000e+00> : vector<16x64xf32>
    %2 = tpu.matmul %0, %1, %cst {dimension_numbers = #tpu.dot_dimension_numbers<[1], [0], [0], [1], [0, 0, 1, 1], [], []>} : vector<16x16xf32>, vector<16x64xf32>, vector<16x64xf32> -> vector<16x64xf32>
    %c0_3 = arith.constant 0 : index
    %c0_4 = arith.constant 0 : index
    %3 = vector.load %arg3[%c0_3, %c0_4] : memref<16x64xf32, #tpu.memory_space<vmem>>, vector<16x64xf32>
    %cst_5 = arith.constant dense<0.000000e+00> : vector<16x16xf32>
    %4 = tpu.matmul %2, %3, %cst_5 {dimension_numbers = #tpu.dot_dimension_numbers<[1], [1], [0], [0], [0, 0, 1, 0], [], []>} : vector<16x64xf32>, vector<16x64xf32>, vector<16x16xf32> -> vector<16x16xf32>
    %c0_6 = arith.constant 0 : index
    %c0_7 = arith.constant 0 : index
    %5 = vector.load %arg4[%c0_6, %c0_7] : memref<3x16xf32, #tpu.memory_space<vmem>>, vector<1x16xf32>
    %6 = vector.broadcast %5 : vector<1x16xf32> to vector<16x16xf32>
    %7 = arith.addf %4, %6 : vector<16x16xf32>
    %cst_8 = arith.constant dense<0.000000e+00> : vector<16xf32>
    %8 = vector.multi_reduction <add>, %7, %cst_8 [1] : vector<16x16xf32> to vector<16xf32>
    %9 = vector.shape_cast %8 : vector<16xf32> to vector<16x1xf32>
    %10 = arith.mulf %7, %7 : vector<16x16xf32>
    %cst_9 = arith.constant dense<0.000000e+00> : vector<16xf32>
    %11 = vector.multi_reduction <add>, %10, %cst_9 [1] : vector<16x16xf32> to vector<16xf32>
    %12 = vector.shape_cast %11 : vector<16xf32> to vector<16x1xf32>
    %cst_10 = arith.constant 6.250000e-02 : f32
    %13 = vector.broadcast %cst_10 : f32 to vector<16x1xf32>
    %14 = arith.mulf %9, %13 : vector<16x1xf32>
    %cst_11 = arith.constant 6.250000e-02 : f32
    %15 = vector.broadcast %cst_11 : f32 to vector<16x1xf32>
    %16 = arith.mulf %12, %15 : vector<16x1xf32>
    %17 = arith.mulf %14, %14 : vector<16x1xf32>
    %18 = arith.subf %16, %17 : vector<16x1xf32>
    %cst_12 = arith.constant 9.99999974E-6 : f32
    %19 = vector.broadcast %cst_12 : f32 to vector<16x1xf32>
    %20 = arith.addf %18, %19 : vector<16x1xf32>
    %21 = math.rsqrt %20 : vector<16x1xf32>
    %22 = vector.broadcast %14 : vector<16x1xf32> to vector<16x16xf32>
    %23 = arith.subf %7, %22 : vector<16x16xf32>
    %24 = vector.broadcast %21 : vector<16x1xf32> to vector<16x16xf32>
    %25 = arith.mulf %23, %24 : vector<16x16xf32>
    %c1 = arith.constant 1 : index
    %c0_13 = arith.constant 0 : index
    %26 = vector.load %arg4[%c1, %c0_13] : memref<3x16xf32, #tpu.memory_space<vmem>>, vector<1x16xf32>
    %27 = vector.broadcast %26 : vector<1x16xf32> to vector<16x16xf32>
    %28 = arith.mulf %25, %27 : vector<16x16xf32>
    %c2 = arith.constant 2 : index
    %c0_14 = arith.constant 0 : index
    %29 = vector.load %arg4[%c2, %c0_14] : memref<3x16xf32, #tpu.memory_space<vmem>>, vector<1x16xf32>
    %30 = vector.broadcast %29 : vector<1x16xf32> to vector<16x16xf32>
    %31 = arith.addf %28, %30 : vector<16x16xf32>
    %c0_15 = arith.constant 0 : index
    %c0_16 = arith.constant 0 : index
    %32 = vector.load %arg5[%c0_15, %c0_16] : memref<16x16xf32, #tpu.memory_space<vmem>>, vector<16x16xf32>
    tpu.vector_store %arg5[%c0_15, %c0_16], %31 {strides = array<i32>} : memref<16x16xf32, #tpu.memory_space<vmem>>, vector<16x16xf32>,
    return
  }
  func.func @transform_0(%arg0: i32) -> (i32, i32) {
    %c0_i32 = arith.constant 0 : i32
    %c0_i32_0 = arith.constant 0 : i32
    return %arg0, %c0_i32 : i32, i32
  }
  func.func @transform_1(%arg0: i32) -> (i32, i32) {
    %c0_i32 = arith.constant 0 : i32
    %c0_i32_0 = arith.constant 0 : i32
    %c0_i32_1 = arith.constant 0 : i32
    return %c0_i32, %c0_i32_0 : i32, i32
  }
  func.func @transform_2(%arg0: i32) -> (i32, i32) {
    %c0_i32 = arith.constant 0 : i32
    %c0_i32_0 = arith.constant 0 : i32
    %c0_i32_1 = arith.constant 0 : i32
    return %c0_i32, %c0_i32_0 : i32, i32
  }
  func.func @transform_3(%arg0: i32) -> (i32, i32) {
    %c0_i32 = arith.constant 0 : i32
    %c0_i32_0 = arith.constant 0 : i32
    %c0_i32_1 = arith.constant 0 : i32
    return %c0_i32, %c0_i32_0 : i32, i32
  }
  func.func @transform_4(%arg0: i32) -> (i32, i32) {
    %c0_i32 = arith.constant 0 : i32
    %c0_i32_0 = arith.constant 0 : i32
    return %arg0, %c0_i32 : i32, i32
  }
}

module attributes {stable_mosaic.version = 11 : i64} {
  func.func @_gcn_relu_kernel(%arg0: i32, %arg1: memref<16x16xf32, #tpu.memory_space<vmem>>, %arg2: memref<16x32xf32, #tpu.memory_space<vmem>>, %arg3: memref<64x32xf32, #tpu.memory_space<vmem>>, %arg4: memref<1x64xf32, #tpu.memory_space<vmem>>, %arg5: memref<16x64xf32, #tpu.memory_space<vmem>>) attributes {dimension_semantics = [#tpu.dimension_semantics<parallel>], iteration_bounds = array<i64: 1>, scalar_prefetch = 0 : i64, scratch_operands = 0 : i64, tpu.core_type = #tpu.core_type<tc>, window_params = [{transform_indices = @transform_0, window_bounds = array<i64: 16, 16>}, {pipeline_mode = #tpu.pipeline_mode<synchronous>, transform_indices = @transform_1, window_bounds = array<i64: 16, 32>}, {pipeline_mode = #tpu.pipeline_mode<synchronous>, transform_indices = @transform_2, window_bounds = array<i64: 64, 32>}, {pipeline_mode = #tpu.pipeline_mode<synchronous>, transform_indices = @transform_3, window_bounds = array<i64: 1, 64>}, {transform_indices = @transform_4, window_bounds = array<i64: 16, 64>}]} {
    %c0 = arith.constant 0 : index
    %c0_0 = arith.constant 0 : index
    %0 = vector.load %arg1[%c0, %c0_0] : memref<16x16xf32, #tpu.memory_space<vmem>>, vector<16x16xf32>
    %c0_1 = arith.constant 0 : index
    %c0_2 = arith.constant 0 : index
    %1 = vector.load %arg2[%c0_1, %c0_2] : memref<16x32xf32, #tpu.memory_space<vmem>>, vector<16x32xf32>
    %cst = arith.constant dense<0.000000e+00> : vector<16x32xf32>
    %2 = tpu.matmul %0, %1, %cst {dimension_numbers = #tpu.dot_dimension_numbers<[1], [0], [0], [1], [0, 0, 1, 1], [], []>} : vector<16x16xf32>, vector<16x32xf32>, vector<16x32xf32> -> vector<16x32xf32>
    %c0_3 = arith.constant 0 : index
    %c0_4 = arith.constant 0 : index
    %3 = vector.load %arg3[%c0_3, %c0_4] : memref<64x32xf32, #tpu.memory_space<vmem>>, vector<64x32xf32>
    %cst_5 = arith.constant dense<0.000000e+00> : vector<16x64xf32>
    %4 = tpu.matmul %2, %3, %cst_5 {dimension_numbers = #tpu.dot_dimension_numbers<[1], [1], [0], [0], [0, 0, 1, 0], [], []>} : vector<16x32xf32>, vector<64x32xf32>, vector<16x64xf32> -> vector<16x64xf32>
    %c0_6 = arith.constant 0 : index
    %c0_7 = arith.constant 0 : index
    %5 = vector.load %arg4[%c0_6, %c0_7] : memref<1x64xf32, #tpu.memory_space<vmem>>, vector<1x64xf32>
    %6 = vector.broadcast %5 : vector<1x64xf32> to vector<16x64xf32>
    %7 = arith.addf %4, %6 : vector<16x64xf32>
    %cst_8 = arith.constant 0.000000e+00 : f32
    %8 = vector.broadcast %cst_8 : f32 to vector<16x64xf32>
    %9 = arith.maximumf %7, %8 : vector<16x64xf32>
    %c0_9 = arith.constant 0 : index
    %c0_10 = arith.constant 0 : index
    %10 = vector.load %arg5[%c0_9, %c0_10] : memref<16x64xf32, #tpu.memory_space<vmem>>, vector<16x64xf32>
    tpu.vector_store %arg5[%c0_9, %c0_10], %9 {strides = array<i32>} : memref<16x64xf32, #tpu.memory_space<vmem>>, vector<16x64xf32>,
    return
  }
  func.func @transform_0(%arg0: i32) -> (i32, i32) {
    %c0_i32 = arith.constant 0 : i32
    %c0_i32_0 = arith.constant 0 : i32
    return %arg0, %c0_i32 : i32, i32
  }
  func.func @transform_1(%arg0: i32) -> (i32, i32) {
    %c0_i32 = arith.constant 0 : i32
    %c0_i32_0 = arith.constant 0 : i32
    %c0_i32_1 = arith.constant 0 : i32
    return %c0_i32, %c0_i32_0 : i32, i32
  }
  func.func @transform_2(%arg0: i32) -> (i32, i32) {
    %c0_i32 = arith.constant 0 : i32
    %c0_i32_0 = arith.constant 0 : i32
    %c0_i32_1 = arith.constant 0 : i32
    return %c0_i32, %c0_i32_0 : i32, i32
  }
  func.func @transform_3(%arg0: i32) -> (i32, i32) {
    %c0_i32 = arith.constant 0 : i32
    %c0_i32_0 = arith.constant 0 : i32
    %c0_i32_1 = arith.constant 0 : i32
    return %c0_i32, %c0_i32_0 : i32, i32
  }
  func.func @transform_4(%arg0: i32) -> (i32, i32) {
    %c0_i32 = arith.constant 0 : i32
    %c0_i32_0 = arith.constant 0 : i32
    return %arg0, %c0_i32 : i32, i32
  }
}

</mosaic_0001>

<llo_original>
// kernel: decoder_forward.2
$region0: #{decoder_forward.2}
  #allocation0 [shape = 'u32[]', space=smem, size = 0x4, offset = 0x4, fixed_abs, tag = 'smem constant byte address 0x4 - core index']
  #allocation1 [shape = 'u32[144,128]{1,0:T(1,128)}', space=vmem, size = 0x12000, scoped, tag = 'internal scratch']
  %s0 = inlined_call_operand.vmem [shape: f32[16,16], index: 0, kind: input, shape index: {}]
  %s1 = inlined_call_operand.vmem [shape: f32[16,32], index: 1, kind: input, shape index: {}]
  %s2 = inlined_call_operand.vmem [shape: f32[64,32], index: 2, kind: input, shape index: {}]
  %s3 = inlined_call_operand.vmem [shape: f32[1,64], index: 3, kind: input, shape index: {}]
  %s4 = inlined_call_operand.vmem [shape: f32[16,64], index: 4, kind: output, shape index: {}]
  %s5 = sld [smem:[#allocation0]]
  $region26: #{decoder_forward.2} parent=0
    _
  %s7 = ssub.s32 1, %s5
  %s8 = scalar_select 0, %s7, %s5
  // Predicated region
  $region2: #{decoder_forward.2} parent=0 // pred_check
    _
  $region3: #{decoder_forward.2} parent=0 // pred_check_branch
    %10 = sbr.rel (0) target = $region5
  $region4: #{decoder_forward.2} parent=0 // pred_region
    _
  $region5: #{decoder_forward.2} parent=0 // pred_fallthru
    _
  // Predicated region
  $region6: #{decoder_forward.2} parent=0 // pred_check
    _
  $region7: #{decoder_forward.2} parent=0 // pred_check_branch
    %12 = sbr.rel (0) target = $region9
  $region8: #{decoder_forward.2} parent=0 // pred_region
    _
  $region9: #{decoder_forward.2} parent=0 // pred_fallthru
    _
  // Predicated region
  $region10: #{decoder_forward.2} parent=0 // pred_check
    _
  $region11: #{decoder_forward.2} parent=0 // pred_check_branch
    %14 = sbr.rel (0) target = $region13
  $region12: #{decoder_forward.2} parent=0 // pred_region
    _
  $region13: #{decoder_forward.2} parent=0 // pred_fallthru
    _
  // Predicated region
  $region14: #{decoder_forward.2} parent=0 // pred_check
    _
  $region15: #{decoder_forward.2} parent=0 // pred_check_branch
    %16 = sbr.rel (0) target = $region17
  $region16: #{decoder_forward.2} parent=0 // pred_region
    _
  $region17: #{decoder_forward.2} parent=0 // pred_fallthru
    _
  %v17 = vld [vmem:[%s0] sm:$0xff]
  %v18 = vld [vmem:[%s0 + $0x8] sm:$0xff]
  %v19 = vld [vmem:[%s1] sm:$0xff]
  %v20 = vld [vmem:[%s1 + $0x8] sm:$0xff]
  %vm21 = vcmask 130048
  %v23 = vsel %vm21, %v17, 0
  %v26 = vsel %vm21, %v18, 0
  %28 = vmatprep.subr.mxu0 0.0
  %29 = vmatpush1.msra.mxu0 %v19
  %30 = vmatprep.subr.mxu0 0.0
  %31 = vmatpush1.msra.mxu0 %v20
  %32 = vmatprep.subr.mxu0 0.0
  %33 = vmatpush1.msra.mxu0 0.0
  %34 = vmatprep.subr.mxu0 0.0
  %35 = vmatpush1.msra.mxu0 0.0
  %36 = vmatprep.subr.mxu0 0.0
  %37 = vmatpush1.msra.mxu0 0.0
  %38 = vmatprep.subr.mxu0 0.0
  %39 = vmatpush1.msra.mxu0 0.0
  %40 = vmatprep.subr.mxu0 0.0
  %41 = vmatpush1.msra.mxu0 0.0
  %42 = vmatprep.subr.mxu0 0.0
  %43 = vmatpush1.msra.mxu0 0.0
  %44 = vmatprep.subr.mxu0 0.0
  %45 = vmatpush1.msra.mxu0 0.0
  %46 = vmatprep.subr.mxu0 0.0
  %47 = vmatpush1.msra.mxu0 0.0
  %48 = vmatprep.subr.mxu0 0.0
  %49 = vmatpush1.msra.mxu0 0.0
  %50 = vmatprep.subr.mxu0 0.0
  %51 = vmatpush1.msra.mxu0 0.0
  %52 = vmatprep.subr.mxu0 0.0
  %53 = vmatpush1.msra.mxu0 0.0
  %54 = vmatprep.subr.mxu0 0.0
  %55 = vmatpush1.msra.mxu0 0.0
  %56 = vmatprep.subr.mxu0 0.0
  %57 = vmatpush1.msra.mxu0 0.0
  %58 = vmatprep.subr.mxu0 0.0
  %59 = vmatpush1.msra.mxu0 0.0
  %60 = vmatprep.subr.mxu0 0.0
  %61 = vmatpush1.msra.mxu0 0.0
  %62 = vmatprep.subr.mxu0 0.0
  %63 = vmatpush1.msra.mxu0 0.0
  %64 = vmatprep.subr.mxu0 0.0
  %65 = vmatpush1.msra.mxu0 0.0
  %66 = vmatprep.subr.mxu0 0.0
  %67 = vmatpush1.msra.mxu0 0.0
  %68 = vmatprep.subr.mxu0 0.0
  %69 = vmatpush1.msra.mxu0 0.0
  %70 = vmatprep.subr.mxu0 0.0
  %71 = vmatpush1.msra.mxu0 0.0
  %72 = vmatprep.subr.mxu0 0.0
  %73 = vmatpush1.msra.mxu0 0.0
  %74 = vmatprep.subr.mxu0 0.0
  %75 = vmatpush1.msra.mxu0 0.0
  %76 = vmatprep.subr.mxu0 0.0
  %77 = vmatpush1.msra.mxu0 0.0
  %78 = vmatprep.subr.mxu0 0.0
  %79 = vmatpush1.msra.mxu0 0.0
  %80 = vmatprep.subr.mxu0 0.0
  %81 = vmatpush1.msra.mxu0 0.0
  %82 = vmatprep.subr.mxu0 0.0
  %83 = vmatpush1.msra.mxu0 0.0
  %84 = vmatprep.subr.mxu0 0.0
  %85 = vmatpush1.msra.mxu0 0.0
  %86 = vmatprep.subr.mxu0 0.0
  %87 = vmatpush1.msra.mxu0 0.0
  %88 = vmatprep.subr.mxu0 0.0
  %89 = vmatpush1.msra.mxu0 0.0
  %90 = vmatprep.subr.mxu0 0.0
  %91 = vmatpush1.msra.mxu0 0.0
  %92 = vmatprep.mubr.f32.mxu0 0.0
  %93 = vmatmul.mubr.f32.gmra.mrb[0].mxu0 %v23
  %v94 = vpop.f32.mrb[0].mxu0
  %v95 = vadd.f32 0.0, %v94
  %v96 = vpop.f32.mrb[0].mxu0
  %97 = vmatprep.mubr.f32.mxu0 0.0
  %98 = vmatmul.mubr.f32.gmra.mrb[0].mxu0 %v26
  %v99 = vpop.f32.mrb[0].mxu0
  %v100 = vadd.f32 0.0, %v99
  %v101 = vpop.f32.mrb[0].mxu0
  %102 = vdwg.mxu0
  %v103 = vld [vmem:[%s2] sm:$0xff]
  %v104 = vld [vmem:[%s2 + $0x8] sm:$0xff]
  %v105 = vld [vmem:[%s2 + $0x10] sm:$0xff]
  %v106 = vld [vmem:[%s2 + $0x18] sm:$0xff]
  %v107 = vld [vmem:[%s2 + $0x20] sm:$0xff]
  %v108 = vld [vmem:[%s2 + $0x28] sm:$0xff]
  %v109 = vld [vmem:[%s2 + $0x30] sm:$0xff]
  %v110 = vld [vmem:[%s2 + $0x38] sm:$0xff]
  %v111 = vld [vmem:[%s3] sm:$0x1]
  %v113 = vlaneseq
  %v114 = vshrl.u32 %v113, 7
  %v115 = vsub.s32 0, %v114
  %v116 = vrot.slane %v111, %v115
  %vm118 = vcmask 261120
  %v120 = vsel %vm118, %v95, 0
  %v123 = vsel %vm118, %v100, 0
  %v126 = vsel %vm118, %v103, 0
  %v129 = vsel %vm118, %v104, 0
  %v132 = vsel %vm118, %v105, 0
  %v135 = vsel %vm118, %v106, 0
  %v138 = vsel %vm118, %v107, 0
  %v141 = vsel %vm118, %v108, 0
  %v144 = vsel %vm118, %v109, 0
  %v147 = vsel %vm118, %v110, 0
  %149 = vmatprep.subr.mxu0 0.0
  %150 = vmatpush1.xpose.msra.mxu0 %v126
  %151 = vmatprep.subr.mxu0 0.0
  %152 = vmatpush1.xpose.msra.mxu0 %v129
  %153 = vmatprep.subr.mxu0 0.0
  %154 = vmatpush1.xpose.msra.mxu0 %v132
  %155 = vmatprep.subr.mxu0 0.0
  %156 = vmatpush1.xpose.msra.mxu0 %v135
  %157 = vmatprep.subr.mxu0 0.0
  %158 = vmatpush1.xpose.msra.mxu0 %v138
  %159 = vmatprep.subr.mxu0 0.0
  %160 = vmatpush1.xpose.msra.mxu0 %v141
  %161 = vmatprep.subr.mxu0 0.0
  %162 = vmatpush1.xpose.msra.mxu0 %v144
  %163 = vmatprep.subr.mxu0 0.0
  %164 = vmatpush1.xpose.msra.mxu0 %v147
  %165 = vmatprep.subr.mxu0 0.0
  %166 = vmatpush1.xpose.msra.mxu0 0.0
  %167 = vmatprep.subr.mxu0 0.0
  %168 = vmatpush1.xpose.msra.mxu0 0.0
  %169 = vmatprep.subr.mxu0 0.0
  %170 = vmatpush1.xpose.msra.mxu0 0.0
  %171 = vmatprep.subr.mxu0 0.0
  %172 = vmatpush1.xpose.msra.mxu0 0.0
  %173 = vmatprep.subr.mxu0 0.0
  %174 = vmatpush1.xpose.msra.mxu0 0.0
  %175 = vmatprep.subr.mxu0 0.0
  %176 = vmatpush1.xpose.msra.mxu0 0.0
  %177 = vmatprep.subr.mxu0 0.0
  %178 = vmatpush1.xpose.msra.mxu0 0.0
  %179 = vmatprep.subr.mxu0 0.0
  %180 = vmatpush1.xpose.msra.mxu0 0.0
  %181 = vmatprep.subr.mxu0 0.0
  %182 = vmatpush1.xpose.msra.mxu0 0.0
  %183 = vmatprep.subr.mxu0 0.0
  %184 = vmatpush1.xpose.msra.mxu0 0.0
  %185 = vmatprep.subr.mxu0 0.0
  %186 = vmatpush1.xpose.msra.mxu0 0.0
  %187 = vmatprep.subr.mxu0 0.0
  %188 = vmatpush1.xpose.msra.mxu0 0.0
  %189 = vmatprep.subr.mxu0 0.0
  %190 = vmatpush1.xpose.msra.mxu0 0.0
  %191 = vmatprep.subr.mxu0 0.0
  %192 = vmatpush1.xpose.msra.mxu0 0.0
  %193 = vmatprep.subr.mxu0 0.0
  %194 = vmatpush1.xpose.msra.mxu0 0.0
  %195 = vmatprep.subr.mxu0 0.0
  %196 = vmatpush1.xpose.msra.mxu0 0.0
  %197 = vmatprep.subr.mxu0 0.0
  %198 = vmatpush1.xpose.msra.mxu0 0.0
  %199 = vmatprep.subr.mxu0 0.0
  %200 = vmatpush1.xpose.msra.mxu0 0.0
  %201 = vmatprep.subr.mxu0 0.0
  %202 = vmatpush1.xpose.msra.mxu0 0.0
  %203 = vmatprep.subr.mxu0 0.0
  %204 = vmatpush1.xpose.msra.mxu0 0.0
  %205 = vmatprep.subr.mxu0 0.0
  %206 = vmatpush1.xpose.msra.mxu0 0.0
  %207 = vmatprep.subr.mxu0 0.0
  %208 = vmatpush1.xpose.msra.mxu0 0.0
  %209 = vmatprep.subr.mxu0 0.0
  %210 = vmatpush1.xpose.msra.mxu0 0.0
  %211 = vmatprep.subr.mxu0 0.0
  %212 = vmatpush1.xpose.msra.mxu0 0.0
  %213 = vmatprep.mubr.f32.mxu0 0.0
  %214 = vmatmul.mubr.f32.gmra.mrb[0].mxu0 %v120
  %v215 = vpop.f32.mrb[0].mxu0
  %v216 = vadd.f32 %v116, %v215
  %v217 = vpop.f32.mrb[0].mxu0
  %218 = vmatprep.mubr.f32.mxu0 0.0
  %219 = vmatmul.mubr.f32.gmra.mrb[0].mxu0 %v123
  %v220 = vpop.f32.mrb[0].mxu0
  %v221 = vadd.f32 %v116, %v220
  %v222 = vpop.f32.mrb[0].mxu0
  %223 = vdwg.mxu0
  %v224 = vmax.f32 %v216, 0.0
  %v225 = vmax.f32 %v221, 0.0
  %vm226 = vcmask 523264
  %227 = vst.msk [vmem:[%s4] sm:$0xff] %vm226, %v224
  %228 = vst.msk [vmem:[%s4 + $0x8] sm:$0xff] %vm226, %v225
  // Predicated region
  $region18: #{decoder_forward.2} parent=0 // pred_check
    _
  $region19: #{decoder_forward.2} parent=0 // pred_check_branch
    %230 = sbr.rel (0) target = $region21
  $region20: #{decoder_forward.2} parent=0 // pred_region
    _
  $region21: #{decoder_forward.2} parent=0 // pred_fallthru
    _
  // Predicated region
  $region22: #{decoder_forward.2} parent=0 // pred_check
    _
  $region23: #{decoder_forward.2} parent=0 // pred_check_branch
    %232 = sbr.rel (0) target = $region25
  $region24: #{decoder_forward.2} parent=0 // pred_region
    _
  $region25: #{decoder_forward.2} parent=0 // pred_fallthru
    _

// kernel: decoder_forward.3
$region0: #{decoder_forward.3}
  #allocation0 [shape = 'u32[]', space=smem, size = 0x4, offset = 0x4, fixed_abs, tag = 'smem constant byte address 0x4 - core index']
  #allocation1 [shape = 'u32[144,128]{1,0:T(1,128)}', space=vmem, size = 0x12000, scoped, tag = 'internal scratch']
  %s0 = inlined_call_operand.vmem [shape: f32[16,16], index: 0, kind: input, shape index: {}]
  %s1 = inlined_call_operand.vmem [shape: f32[16,64], index: 1, kind: input, shape index: {}]
  %s2 = inlined_call_operand.vmem [shape: f32[16,64], index: 2, kind: input, shape index: {}]
  %s3 = inlined_call_operand.vmem [shape: f32[3,16], index: 3, kind: input, shape index: {}]
  %s4 = inlined_call_operand.hbm [shape: f32[16,16], index: 4, kind: output, shape index: {}]
  %s5 = sld [smem:[#allocation0]]
  $region26: #{decoder_forward.3} parent=0
    _
  %s7 = ssub.s32 1, %s5
  %s8 = scalar_select 0, %s7, %s5
  $region1: #{decoder_forward.3} parent=0
    #allocation2 [shape = 'u8[8192]{0}', space=vmem, size = 0x2000, scoped, tag = 'output window, operand 0, single buffered']
    #allocation3 [shape = 's32[1]{0}', space=sflag, size = 0x4, scoped, tag = 'scoped memory for decoder_forward.3']
    %9 = vsyncpa [#allocation3], 0
    // Predicated region
    $region2: #{decoder_forward.3} parent=1 // pred_check
      _
    $region3: #{decoder_forward.3} parent=1 // pred_check_branch
      %11 = sbr.rel (0) target = $region5
    $region4: #{decoder_forward.3} parent=1 // pred_region
      _
    $region5: #{decoder_forward.3} parent=1 // pred_fallthru
      _
    // Predicated region
    $region6: #{decoder_forward.3} parent=1 // pred_check
      _
    $region7: #{decoder_forward.3} parent=1 // pred_check_branch
      %13 = sbr.rel (0) target = $region9
    $region8: #{decoder_forward.3} parent=1 // pred_region
      _
    $region9: #{decoder_forward.3} parent=1 // pred_fallthru
      _
    // Predicated region
    $region10: #{decoder_forward.3} parent=1 // pred_check
      _
    $region11: #{decoder_forward.3} parent=1 // pred_check_branch
      %15 = sbr.rel (0) target = $region13
    $region12: #{decoder_forward.3} parent=1 // pred_region
      _
    $region13: #{decoder_forward.3} parent=1 // pred_fallthru
      _
    // Predicated region
    $region14: #{decoder_forward.3} parent=1 // pred_check
      _
    $region15: #{decoder_forward.3} parent=1 // pred_check_branch
      %17 = sbr.rel (0) target = $region17
    $region16: #{decoder_forward.3} parent=1 // pred_region
      _
    $region17: #{decoder_forward.3} parent=1 // pred_fallthru
      _
    %v18 = vld [vmem:[%s0] sm:$0xff]
    %v19 = vld [vmem:[%s0 + $0x8] sm:$0xff]
    %v20 = vld [vmem:[%s1] sm:$0xff]
    %v21 = vld [vmem:[%s1 + $0x8] sm:$0xff]
    %vm22 = vcmask 130048
    %v24 = vsel %vm22, %v18, 0
    %v27 = vsel %vm22, %v19, 0
    %29 = vmatprep.subr.mxu0 0.0
    %30 = vmatpush1.msra.mxu0 %v20
    %31 = vmatprep.subr.mxu0 0.0
    %32 = vmatpush1.msra.mxu0 %v21
    %33 = vmatprep.subr.mxu0 0.0
    %34 = vmatpush1.msra.mxu0 0.0
    %35 = vmatprep.subr.mxu0 0.0
    %36 = vmatpush1.msra.mxu0 0.0
    %37 = vmatprep.subr.mxu0 0.0
    %38 = vmatpush1.msra.mxu0 0.0
    %39 = vmatprep.subr.mxu0 0.0
    %40 = vmatpush1.msra.mxu0 0.0
    %41 = vmatprep.subr.mxu0 0.0
    %42 = vmatpush1.msra.mxu0 0.0
    %43 = vmatprep.subr.mxu0 0.0
    %44 = vmatpush1.msra.mxu0 0.0
    %45 = vmatprep.subr.mxu0 0.0
    %46 = vmatpush1.msra.mxu0 0.0
    %47 = vmatprep.subr.mxu0 0.0
    %48 = vmatpush1.msra.mxu0 0.0
    %49 = vmatprep.subr.mxu0 0.0
    %50 = vmatpush1.msra.mxu0 0.0
    %51 = vmatprep.subr.mxu0 0.0
    %52 = vmatpush1.msra.mxu0 0.0
    %53 = vmatprep.subr.mxu0 0.0
    %54 = vmatpush1.msra.mxu0 0.0
    %55 = vmatprep.subr.mxu0 0.0
    %56 = vmatpush1.msra.mxu0 0.0
    %57 = vmatprep.subr.mxu0 0.0
    %58 = vmatpush1.msra.mxu0 0.0
    %59 = vmatprep.subr.mxu0 0.0
    %60 = vmatpush1.msra.mxu0 0.0
    %61 = vmatprep.subr.mxu0 0.0
    %62 = vmatpush1.msra.mxu0 0.0
    %63 = vmatprep.subr.mxu0 0.0
    %64 = vmatpush1.msra.mxu0 0.0
    %65 = vmatprep.subr.mxu0 0.0
    %66 = vmatpush1.msra.mxu0 0.0
    %67 = vmatprep.subr.mxu0 0.0
    %68 = vmatpush1.msra.mxu0 0.0
    %69 = vmatprep.subr.mxu0 0.0
    %70 = vmatpush1.msra.mxu0 0.0
    %71 = vmatprep.subr.mxu0 0.0
    %72 = vmatpush1.msra.mxu0 0.0
    %73 = vmatprep.subr.mxu0 0.0
    %74 = vmatpush1.msra.mxu0 0.0
    %75 = vmatprep.subr.mxu0 0.0
    %76 = vmatpush1.msra.mxu0 0.0
    %77 = vmatprep.subr.mxu0 0.0
    %78 = vmatpush1.msra.mxu0 0.0
    %79 = vmatprep.subr.mxu0 0.0
    %80 = vmatpush1.msra.mxu0 0.0
    %81 = vmatprep.subr.mxu0 0.0
    %82 = vmatpush1.msra.mxu0 0.0
    %83 = vmatprep.subr.mxu0 0.0
    %84 = vmatpush1.msra.mxu0 0.0
    %85 = vmatprep.subr.mxu0 0.0
    %86 = vmatpush1.msra.mxu0 0.0
    %87 = vmatprep.subr.mxu0 0.0
    %88 = vmatpush1.msra.mxu0 0.0
    %89 = vmatprep.subr.mxu0 0.0
    %90 = vmatpush1.msra.mxu0 0.0
    %91 = vmatprep.subr.mxu0 0.0
    %92 = vmatpush1.msra.mxu0 0.0
    %93 = vmatprep.mubr.f32.mxu0 0.0
    %94 = vmatmul.mubr.f32.gmra.mrb[0].mxu0 %v24
    %v95 = vpop.f32.mrb[0].mxu0
    %v96 = vadd.f32 0.0, %v95
    %v97 = vpop.f32.mrb[0].mxu0
    %98 = vmatprep.mubr.f32.mxu0 0.0
    %99 = vmatmul.mubr.f32.gmra.mrb[0].mxu0 %v27
    %v100 = vpop.f32.mrb[0].mxu0
    %v101 = vadd.f32 0.0, %v100
    %v102 = vpop.f32.mrb[0].mxu0
    %103 = vdwg.mxu0
    %v104 = vld [vmem:[%s2] sm:$0xff]
    %v105 = vld [vmem:[%s2 + $0x8] sm:$0xff]
    %v106 = vld [vmem:[%s3] sm:$0x1]
    %v107 = vlaneseq
    %v108 = vshrl.u32 %v107, 7
    %v109 = vsub.s32 0, %v108
    %v110 = vrot.slane %v106, %v109
    %vm111 = vcmask 523264
    %v113 = vsel %vm111, %v96, 0
    %v116 = vsel %vm111, %v101, 0
    %v119 = vsel %vm111, %v104, 0
    %v122 = vsel %vm111, %v105, 0
    %124 = vmatprep.subr.mxu0 0.0
    %125 = vmatpush1.xpose.msra.mxu0 %v119
    %126 = vmatprep.subr.mxu0 0.0
    %127 = vmatpush1.xpose.msra.mxu0 %v122
    %128 = vmatprep.subr.mxu0 0.0
    %129 = vmatpush1.xpose.msra.mxu0 0.0
    %130 = vmatprep.subr.mxu0 0.0
    %131 = vmatpush1.xpose.msra.mxu0 0.0
    %132 = vmatprep.subr.mxu0 0.0
    %133 = vmatpush1.xpose.msra.mxu0 0.0
    %134 = vmatprep.subr.mxu0 0.0
    %135 = vmatpush1.xpose.msra.mxu0 0.0
    %136 = vmatprep.subr.mxu0 0.0
    %137 = vmatpush1.xpose.msra.mxu0 0.0
    %138 = vmatprep.subr.mxu0 0.0
    %139 = vmatpush1.xpose.msra.mxu0 0.0
    %140 = vmatprep.subr.mxu0 0.0
    %141 = vmatpush1.xpose.msra.mxu0 0.0
    %142 = vmatprep.subr.mxu0 0.0
    %143 = vmatpush1.xpose.msra.mxu0 0.0
    %144 = vmatprep.subr.mxu0 0.0
    %145 = vmatpush1.xpose.msra.mxu0 0.0
    %146 = vmatprep.subr.mxu0 0.0
    %147 = vmatpush1.xpose.msra.mxu0 0.0
    %148 = vmatprep.subr.mxu0 0.0
    %149 = vmatpush1.xpose.msra.mxu0 0.0
    %150 = vmatprep.subr.mxu0 0.0
    %151 = vmatpush1.xpose.msra.mxu0 0.0
    %152 = vmatprep.subr.mxu0 0.0
    %153 = vmatpush1.xpose.msra.mxu0 0.0
    %154 = vmatprep.subr.mxu0 0.0
    %155 = vmatpush1.xpose.msra.mxu0 0.0
    %156 = vmatprep.subr.mxu0 0.0
    %157 = vmatpush1.xpose.msra.mxu0 0.0
    %158 = vmatprep.subr.mxu0 0.0
    %159 = vmatpush1.xpose.msra.mxu0 0.0
    %160 = vmatprep.subr.mxu0 0.0
    %161 = vmatpush1.xpose.msra.mxu0 0.0
    %162 = vmatprep.subr.mxu0 0.0
    %163 = vmatpush1.xpose.msra.mxu0 0.0
    %164 = vmatprep.subr.mxu0 0.0
    %165 = vmatpush1.xpose.msra.mxu0 0.0
    %166 = vmatprep.subr.mxu0 0.0
    %167 = vmatpush1.xpose.msra.mxu0 0.0
    %168 = vmatprep.subr.mxu0 0.0
    %169 = vmatpush1.xpose.msra.mxu0 0.0
    %170 = vmatprep.subr.mxu0 0.0
    %171 = vmatpush1.xpose.msra.mxu0 0.0
    %172 = vmatprep.subr.mxu0 0.0
    %173 = vmatpush1.xpose.msra.mxu0 0.0
    %174 = vmatprep.subr.mxu0 0.0
    %175 = vmatpush1.xpose.msra.mxu0 0.0
    %176 = vmatprep.subr.mxu0 0.0
    %177 = vmatpush1.xpose.msra.mxu0 0.0
    %178 = vmatprep.subr.mxu0 0.0
    %179 = vmatpush1.xpose.msra.mxu0 0.0
    %180 = vmatprep.subr.mxu0 0.0
    %181 = vmatpush1.xpose.msra.mxu0 0.0
    %182 = vmatprep.subr.mxu0 0.0
    %183 = vmatpush1.xpose.msra.mxu0 0.0
    %184 = vmatprep.subr.mxu0 0.0
    %185 = vmatpush1.xpose.msra.mxu0 0.0
    %186 = vmatprep.subr.mxu0 0.0
    %187 = vmatpush1.xpose.msra.mxu0 0.0
    %188 = vmatprep.mubr.f32.mxu0 0.0
    %189 = vmatmul.mubr.f32.gmra.mrb[0].mxu0 %v113
    %v190 = vpop.f32.mrb[0].mxu0
    %v191 = vadd.f32 %v110, %v190
    %v192 = vpop.f32.mrb[0].mxu0
    %193 = vmatprep.mubr.f32.mxu0 0.0
    %194 = vmatmul.mubr.f32.gmra.mrb[0].mxu0 %v116
    %v195 = vpop.f32.mrb[0].mxu0
    %v196 = vadd.f32 %v110, %v195
    %v197 = vpop.f32.mrb[0].mxu0
    %198 = vdwg.mxu0
    %v199 = vsel %vm22, %v191, 0.0
    %200 = vadd.xlane.f32.xlu0 %v199
    %v201 = vpop.xlane.xlu0 %200
    %v202 = vsel %vm22, %v196, 0.0
    %203 = vadd.xlane.f32.xlu0 %v202
    %v204 = vpop.xlane.xlu0 %203
    %v205 = vmul.f32 %v191, %v191
    %v206 = vmul.f32 %v196, %v196
    %v207 = vsel %vm22, %v205, 0.0
    %208 = vadd.xlane.f32.xlu0 %v207
    %v209 = vpop.xlane.xlu0 %208
    %v210 = vsel %vm22, %v206, 0.0
    %211 = vadd.xlane.f32.xlu0 %v210
    %v212 = vpop.xlane.xlu0 %211
    %v213 = vmul.f32 %v201, 0.0625
    %v214 = vmul.f32 %v204, 0.0625
    %v215 = vmul.f32 %v209, 0.0625
    %v216 = vmul.f32 %v212, 0.0625
    %v217 = vmul.f32 %v213, %v213
    %v218 = vmul.f32 %v214, %v214
    %v219 = vsub.f32 %v215, %v217
    %v220 = vsub.f32 %v216, %v218
    %v221 = vadd.f32 %v219, 1e-05
    %v222 = vadd.f32 %v220, 1e-05
    %v223 = vrsqrt.pop %v221
    %v224 = vrsqrt.pop %v222
    %v225 = vsub.f32 %v191, %v213
    %v226 = vsub.f32 %v196, %v214
    %v227 = vmul.f32 %v225, %v223
    %v228 = vmul.f32 %v226, %v224
    %v229 = vld [vmem:[%s3 + $0x1] sm:$0x1]
    %v230 = vlaneseq
    %v231 = vshrl.u32 %v230, 7
    %v232 = vsub.s32 0, %v231
    %v233 = vrot.slane %v229, %v232
    %v234 = vmul.f32 %v227, %v233
    %v235 = vmul.f32 %v228, %v233
    %v236 = vld [vmem:[%s3 + $0x2] sm:$0x1]
    %v237 = vlaneseq
    %v238 = vshrl.u32 %v237, 7
    %v239 = vsub.s32 0, %v238
    %v240 = vrot.slane %v236, %v239
    %v241 = vadd.f32 %v234, %v240
    %v242 = vadd.f32 %v235, %v240
    %243 = vst.msk [vmem:[#allocation2] sm:$0xff] %vm22, %v241
    %244 = vst.msk [vmem:[#allocation2 + $0x8] sm:$0xff] %vm22, %v242
    // Predicated region
    $region18: #{decoder_forward.3} parent=1 // pred_check
      _
    $region19: #{decoder_forward.3} parent=1 // pred_check_branch
      %246 = sbr.rel (0) target = $region21
    $region20: #{decoder_forward.3} parent=1 // pred_region
      %s248 = ssub.s32 256, 256
      %249 = vsyncadd [#allocation3], %s248
      %s250 = sshll.u32 [#allocation2], 4
      %s251 = int_to_ptr.vmem [resolvable:$true] %s250
      %256 = dma.vmem_to_hbm [thread:$0]  %s251, 256, %s4, [#allocation3], 128, 128, 8
    $region21: #{decoder_forward.3} parent=1 // pred_fallthru
      _
    // Predicated region
    $region22: #{decoder_forward.3} parent=1 // pred_check
      _
    $region23: #{decoder_forward.3} parent=1 // pred_check_branch
      %258 = sbr.rel (0) target = $region25
    $region24: #{decoder_forward.3} parent=1 // pred_region
      %259 = dma.done [#allocation3], 256
    $region25: #{decoder_forward.3} parent=1 // pred_fallthru
      _
    %260 = vsyncpa [#allocation3], 1

</llo_original>
